<compile_context>
chip_gen: v7x
topology: tpu7x:2x2x1
jax: 0.10.0
libtpu: 0.0.40
codegen_flags: <defaults>
</compile_context>

<pallas_src>
import functools

import jax
import jax.numpy as jnp
from jax import lax
from jax.experimental import pallas as pl
from jax.experimental.pallas import tpu as pltpu


# ---------------------------------------------------------------------------
# Pass 1: per-pixel channel mean / max reduction (lane-dense (B, C, H*W)).
# ---------------------------------------------------------------------------
def _reduce_kernel(x_ref, maps_ref, sum_ref, max_ref, *, C, Ct, need_mask):
    # x_ref:    (1, Ct, HWt)  VMEM  lane-dense channel tile of the input
    # maps_ref: (1, 2, HWt)   VMEM  output block: row 0 = mean, row 1 = max
    # sum_ref:  (1, HWt)      VMEM  running channel-sum accumulator
    # max_ref:  (1, HWt)      VMEM  running channel-max accumulator
    c_idx = pl.program_id(2)
    n_c = pl.num_programs(2)

    x = x_ref[0].astype(jnp.float32)                     # (Ct, HWt)
    if need_mask:
        # cdiv grid: the last channel tile may overrun C; neutralize garbage
        # rows (0 for the sum contribution, -inf for the max contribution).
        ch = c_idx * Ct + lax.broadcasted_iota(jnp.int32, x.shape, 0)
        valid = ch < C
        x_sum = jnp.where(valid, x, jnp.float32(0.0))
        x_max = jnp.where(valid, x, jnp.float32(-jnp.inf))
    else:
        x_sum = x
        x_max = x

    # NOTE(v7x): sum + max are two full-tile VMEM read passes; a fused single
    # traversal only matters once the per-step DMA (v7x HBM) is fast enough
    # that vld becomes the saturating slot.  Kept simple / two-pass here.
    part_sum = jnp.sum(x_sum, axis=0, keepdims=True)     # (1, HWt)
    part_max = jnp.max(x_max, axis=0, keepdims=True)     # (1, HWt)

    @pl.when(c_idx == 0)
    def _init():
        sum_ref[...] = part_sum
        max_ref[...] = part_max

    @pl.when(c_idx > 0)
    def _accumulate():
        sum_ref[...] = sum_ref[...] + part_sum
        max_ref[...] = jnp.maximum(max_ref[...], part_max)

    @pl.when(c_idx == n_c - 1)
    def _finalize():
        maps_ref[0, 0:1, :] = sum_ref[...] * jnp.float32(1.0 / C)
        maps_ref[0, 1:2, :] = max_ref[...]


# ---------------------------------------------------------------------------
# Pass 2: KxK conv over the [mean, max] maps + sigmoid (tiny, once per batch).
# ---------------------------------------------------------------------------
def _conv_kernel(maps_ref, w_ref, o_ref, pad_ref, *, H, W, K, PAD):
    # maps_ref: (1, 2, H, W)      VMEM  [mean, max] spatial maps
    # w_ref:    (2*K*K,)          SMEM  flattened conv weight [cin, kh, kw]
    # o_ref:    (1, 1, H, W)      VMEM  output block
    # pad_ref:  (2, H+2P, W+2P)   VMEM  zero-padded concat buffer
    #
    # Re-zero the padded buffer every batch step: a few KiB of VMEM stores
    # (~1% of the conv work) and it stays correct when the "parallel" batch
    # axis is split across TensorCores (scratch is per-core, so a zero-once
    # at b==0 guard would leave garbage borders on the second TC).
    pad_ref[...] = jnp.zeros_like(pad_ref)

    # Whole-slab interior stores (2 stores, not 2*H masked per-row stores).
    pad_ref[0, PAD:PAD + H, PAD:PAD + W] = maps_ref[0, 0]
    pad_ref[1, PAD:PAD + H, PAD:PAD + W] = maps_ref[0, 1]

    # KxK conv, 2 input channels -> 1 output channel, no bias.  One VMEM band
    # load per (cin, kh); the K horizontal taps are static shifts of the band.
    # Kept on the VPU on purpose: one output channel leaves the MXU <1% used.
    ws = [w_ref[i] for i in range(2 * K * K)]            # hoisted scalars
    acc = jnp.zeros((H, W), jnp.float32)
    for cin in range(2):
        for di in range(K):
            band = pad_ref[cin, di:di + H, :]            # (H, W + 2*PAD)
            for dj in range(K):
                acc = acc + ws[cin * K * K + di * K + dj] * band[:, dj:dj + W]

    o_ref[0, 0] = jax.nn.sigmoid(acc).astype(o_ref.dtype)


# ---------------------------------------------------------------------------
# Tiling helpers (generation-aware).
# ---------------------------------------------------------------------------
def _vmem_budgets():
    """Returns (per-input-buffer budget, vmem_limit_bytes)."""
    cap = 64 * 1024 * 1024
    try:
        cap = int(pltpu.get_tpu_info().vmem_capacity_bytes)
    except Exception:
        pass
    if cap >= 100 * 1024 * 1024:              # v5e / v6e: 128 MiB VMEM
        return 24 * 1024 * 1024, 96 * 1024 * 1024
    # v7x (64 MiB per TensorCore) or unknown: stay conservative.
    return 10 * 1024 * 1024, 44 * 1024 * 1024


def _pick_c_tile(C, HWt, itemsize, budget_bytes):
    """Largest channel tile whose single input buffer fits the budget.

    Result is either the full C (no tail mask) or a multiple of the dtype's
    sublane packing factor (8 f32 / 16 bf16 / 32 int8), so the dominant
    (B, C, H*W) stream never needs padded / relayouted tiles.  The grid uses
    cdiv + an in-kernel tail mask, so C need not divide evenly.
    """
    pack = 8 * max(1, 4 // max(1, itemsize))
    per_channel = max(1, HWt * itemsize)
    max_ct = max(1, budget_bytes // per_channel)
    if C <= max_ct:
        return C
    return max(pack, (max_ct // pack) * pack)


def _pick_hw_split(B, HW):
    """Split the spatial axis so both TensorCores get work when B is small."""
    if B == 1 and HW % 256 == 0:
        return 2
    return 1


# ---------------------------------------------------------------------------
# Wrapper.
# ---------------------------------------------------------------------------
def spatial_attention(x, weight):
    """x: (B, C, H, W) float; weight: (1, 2, K, K) Conv2d weight (no bias)."""
    B, C, H, W = x.shape
    K = weight.shape[-1]
    assert K in (3, 7), "kernel size must be 3 or 7"
    PAD = 3 if K == 7 else 1
    HW = H * W
    itemsize = x.dtype.itemsize

    budget, vmem_limit = _vmem_budgets()
    n_hw = _pick_hw_split(B, HW)
    HWt = HW // n_hw
    Ct = _pick_c_tile(C, HWt, itemsize, budget)
    n_c = (C + Ct - 1) // Ct
    need_mask = (C % Ct) != 0

    # Lane-dense view for the channel reduction (contiguous reshape: free).
    x_flat = x.reshape(B, C, HW)
    w_flat = weight.reshape(-1).astype(jnp.float32)      # (2*K*K,) [cin,kh,kw]

    # ---- Pass 1: per-pixel channel mean / max (the HBM-bound stream) ------
    maps = pl.pallas_call(
        functools.partial(_reduce_kernel, C=C, Ct=Ct, need_mask=need_mask),
        out_shape=jax.ShapeDtypeStruct((B, 2, HW), jnp.float32),
        grid_spec=pltpu.PrefetchScalarGridSpec(
            num_scalar_prefetch=0,
            grid=(B, n_hw, n_c),
            in_specs=[pl.BlockSpec((1, Ct, HWt), lambda b, s, c: (b, c, s))],
            out_specs=pl.BlockSpec((1, 2, HWt), lambda b, s, c: (b, 0, s)),
            scratch_shapes=[
                pltpu.VMEM((1, HWt), jnp.float32),       # running sum
                pltpu.VMEM((1, HWt), jnp.float32),       # running max
            ],
        ),
        compiler_params=pltpu.CompilerParams(
            dimension_semantics=("parallel", "parallel", "arbitrary"),
            vmem_limit_bytes=vmem_limit,
        ),
        cost_estimate=pl.CostEstimate(
            flops=2 * B * C * HW,
            transcendentals=0,
            bytes_accessed=B * C * HW * itemsize + B * 2 * HW * 4,
        ),
    )(x_flat)

    # ---- Pass 2: KxK conv over [mean, max] + sigmoid -----------------------
    maps4 = maps.reshape(B, 2, H, W)                     # free (metadata only)
    out = pl.pallas_call(
        functools.partial(_conv_kernel, H=H, W=W, K=K, PAD=PAD),
        out_shape=jax.ShapeDtypeStruct((B, 1, H, W), x.dtype),
        grid_spec=pltpu.PrefetchScalarGridSpec(
            num_scalar_prefetch=0,
            grid=(B,),
            in_specs=[
                pl.BlockSpec((1, 2, H, W), lambda b: (b, 0, 0, 0)),
                pl.BlockSpec(memory_space=pltpu.MemorySpace.SMEM),
            ],
            out_specs=pl.BlockSpec((1, 1, H, W), lambda b: (b, 0, 0, 0)),
            scratch_shapes=[
                pltpu.VMEM((2, H + 2 * PAD, W + 2 * PAD), jnp.float32),
            ],
        ),
        compiler_params=pltpu.CompilerParams(
            dimension_semantics=("parallel",),
            vmem_limit_bytes=32 * 1024 * 1024,
        ),
        cost_estimate=pl.CostEstimate(
            flops=B * 2 * 2 * K * K * HW,
            transcendentals=B * HW,
            bytes_accessed=B * 2 * HW * 4 + B * HW * itemsize,
        ),
    )(maps4, w_flat)
    return out


# ---------------------------------------------------------------------------
# Pure-JAX reference (matches the PyTorch forward).
# ---------------------------------------------------------------------------
def _reference(x, weight):
    avg_out = jnp.mean(x, axis=1, keepdims=True)
    max_out = jnp.max(x, axis=1, keepdims=True)
    cat = jnp.concatenate([avg_out, max_out], axis=1)    # (B, 2, H, W)
    K = weight.shape[-1]
    pad = 3 if K == 7 else 1
    y = lax.conv_general_dilated(
        cat, weight,
        window_strides=(1, 1),
        padding=[(pad, pad), (pad, pad)],
        dimension_numbers=("NCHW", "OIHW", "NCHW"))
    return jax.nn.sigmoid(y)


if __name__ == "__main__":
    key = jax.random.PRNGKey(0)
    kx, kw = jax.random.split(key)

    B, C, H, W = 2, 4, 16, 16
    kernel_size = 7

    x = jax.random.normal(kx, (B, C, H, W), dtype=jnp.float32)

    # Deterministic Conv2d(2, 1, 7, bias=False) weight init (uniform with the
    # PyTorch-default kaiming-uniform bound 1/sqrt(fan_in)).
    fan_in = 2 * kernel_size * kernel_size
    bound = 1.0 / (fan_in ** 0.5)
    weight = jax.random.uniform(
        kw, (1, 2, kernel_size, kernel_size),
        minval=-bound, maxval=bound, dtype=jnp.float32)

    out = spatial_attention(x, weight)
    out = jax.block_until_ready(out)

    ref = _reference(x, weight)
    assert out.shape == (B, 1, H, W)
    assert jnp.allclose(out, ref, atol=1e-5, rtol=1e-5), "mismatch vs reference"

    print("KERNEL_OK")
</pallas_src>

<mosaic_0001>
module attributes {stable_mosaic.version = 11 : i64} {
  func.func @_reduce_kernel(%arg0: i32, %arg1: i32, %arg2: i32, %arg3: memref<1x4x256xf32, #tpu.memory_space<vmem>>, %arg4: memref<1x2x256xf32, #tpu.memory_space<vmem>>, %arg5: memref<1x256xf32, #tpu.memory_space<vmem>>, %arg6: memref<1x256xf32, #tpu.memory_space<vmem>>) attributes {dimension_semantics = [#tpu.dimension_semantics<parallel>, #tpu.dimension_semantics<parallel>, #tpu.dimension_semantics<arbitrary>], iteration_bounds = array<i64: 2, 1, 1>, scalar_prefetch = 0 : i64, scratch_operands = 2 : i64, tpu.core_type = #tpu.core_type<tc>, window_params = [{transform_indices = @transform_0, window_bounds = array<i64: 1, 4, 256>}, {transform_indices = @transform_1, window_bounds = array<i64: 1, 2, 256>}]} {
    %c0 = arith.constant 0 : index
    %c0_0 = arith.constant 0 : index
    %c0_1 = arith.constant 0 : index
    %0 = vector.load %arg3[%c0, %c0_0, %c0_1] : memref<1x4x256xf32, #tpu.memory_space<vmem>>, vector<1x4x256xf32>
    %1 = vector.shape_cast %0 : vector<1x4x256xf32> to vector<4x256xf32>
    %cst = arith.constant dense<0.000000e+00> : vector<256xf32>
    %2 = vector.multi_reduction <add>, %1, %cst [0] : vector<4x256xf32> to vector<256xf32>
    %3 = vector.shape_cast %2 : vector<256xf32> to vector<1x256xf32>
    %cst_2 = arith.constant dense<0xFF800000> : vector<256xf32>
    %4 = vector.multi_reduction <maximumf>, %1, %cst_2 [0] : vector<4x256xf32> to vector<256xf32>
    %5 = vector.shape_cast %4 : vector<256xf32> to vector<1x256xf32>
    %c0_i32 = arith.constant 0 : i32
    %6 = arith.cmpi eq, %arg2, %c0_i32 : i32
    %7 = arith.extui %6 : i1 to i32
    %c0_i32_3 = arith.constant 0 : i32
    %8 = arith.cmpi ne, %7, %c0_i32_3 : i32
    scf.if %8 {
      %c0_8 = arith.constant 0 : index
      %c0_9 = arith.constant 0 : index
      %15 = vector.load %arg5[%c0_8, %c0_9] : memref<1x256xf32, #tpu.memory_space<vmem>>, vector<1x256xf32>
      tpu.vector_store %arg5[%c0_8, %c0_9], %3 {strides = array<i32>} : memref<1x256xf32, #tpu.memory_space<vmem>>, vector<1x256xf32>,
      %c0_10 = arith.constant 0 : index
      %c0_11 = arith.constant 0 : index
      %16 = vector.load %arg6[%c0_10, %c0_11] : memref<1x256xf32, #tpu.memory_space<vmem>>, vector<1x256xf32>
      tpu.vector_store %arg6[%c0_10, %c0_11], %5 {strides = array<i32>} : memref<1x256xf32, #tpu.memory_space<vmem>>, vector<1x256xf32>,
    } else {
    }
    %c0_i32_4 = arith.constant 0 : i32
    %9 = arith.cmpi sgt, %arg2, %c0_i32_4 : i32
    %10 = arith.extui %9 : i1 to i32
    %c0_i32_5 = arith.constant 0 : i32
    %11 = arith.cmpi ne, %10, %c0_i32_5 : i32
    scf.if %11 {
      %c0_8 = arith.constant 0 : index
      %c0_9 = arith.constant 0 : index
      %15 = vector.load %arg5[%c0_8, %c0_9] : memref<1x256xf32, #tpu.memory_space<vmem>>, vector<1x256xf32>
      %16 = arith.addf %15, %3 : vector<1x256xf32>
      %c0_10 = arith.constant 0 : index
      %c0_11 = arith.constant 0 : index
      %17 = vector.load %arg5[%c0_10, %c0_11] : memref<1x256xf32, #tpu.memory_space<vmem>>, vector<1x256xf32>
      tpu.vector_store %arg5[%c0_10, %c0_11], %16 {strides = array<i32>} : memref<1x256xf32, #tpu.memory_space<vmem>>, vector<1x256xf32>,
      %c0_12 = arith.constant 0 : index
      %c0_13 = arith.constant 0 : index
      %18 = vector.load %arg6[%c0_12, %c0_13] : memref<1x256xf32, #tpu.memory_space<vmem>>, vector<1x256xf32>
      %19 = arith.maximumf %18, %5 : vector<1x256xf32>
      %c0_14 = arith.constant 0 : index
      %c0_15 = arith.constant 0 : index
      %20 = vector.load %arg6[%c0_14, %c0_15] : memref<1x256xf32, #tpu.memory_space<vmem>>, vector<1x256xf32>
      tpu.vector_store %arg6[%c0_14, %c0_15], %19 {strides = array<i32>} : memref<1x256xf32, #tpu.memory_space<vmem>>, vector<1x256xf32>,
    } else {
    }
    %c0_i32_6 = arith.constant 0 : i32
    %12 = arith.cmpi eq, %arg2, %c0_i32_6 : i32
    %13 = arith.extui %12 : i1 to i32
    %c0_i32_7 = arith.constant 0 : i32
    %14 = arith.cmpi ne, %13, %c0_i32_7 : i32
    scf.if %14 {
      %c0_8 = arith.constant 0 : index
      %c0_9 = arith.constant 0 : index
      %15 = vector.load %arg5[%c0_8, %c0_9] : memref<1x256xf32, #tpu.memory_space<vmem>>, vector<1x256xf32>
      %cst_10 = arith.constant 2.500000e-01 : f32
      %16 = vector.broadcast %cst_10 : f32 to vector<1x256xf32>
      %17 = arith.mulf %15, %16 : vector<1x256xf32>
      %c0_11 = arith.constant 0 : index
      %c0_12 = arith.constant 0 : index
      %c0_13 = arith.constant 0 : index
      %18 = vector.load %arg4[%c0_11, %c0_12, %c0_13] : memref<1x2x256xf32, #tpu.memory_space<vmem>>, vector<1x1x256xf32>
      %19 = vector.shape_cast %18 : vector<1x1x256xf32> to vector<1x256xf32>
      %20 = vector.shape_cast %17 : vector<1x256xf32> to vector<1x1x256xf32>
      tpu.vector_store %arg4[%c0_11, %c0_12, %c0_13], %20 {strides = array<i32>} : memref<1x2x256xf32, #tpu.memory_space<vmem>>, vector<1x1x256xf32>,
      %c0_14 = arith.constant 0 : index
      %c0_15 = arith.constant 0 : index
      %21 = vector.load %arg6[%c0_14, %c0_15] : memref<1x256xf32, #tpu.memory_space<vmem>>, vector<1x256xf32>
      %c0_16 = arith.constant 0 : index
      %c1 = arith.constant 1 : index
      %c0_17 = arith.constant 0 : index
      %22 = vector.load %arg4[%c0_16, %c1, %c0_17] : memref<1x2x256xf32, #tpu.memory_space<vmem>>, vector<1x1x256xf32>
      %23 = vector.shape_cast %22 : vector<1x1x256xf32> to vector<1x256xf32>
      %24 = vector.shape_cast %21 : vector<1x256xf32> to vector<1x1x256xf32>
      tpu.vector_store %arg4[%c0_16, %c1, %c0_17], %24 {strides = array<i32>} : memref<1x2x256xf32, #tpu.memory_space<vmem>>, vector<1x1x256xf32>,
    } else {
    }
    return
  }
  func.func @transform_0(%arg0: i32, %arg1: i32, %arg2: i32) -> (i32, i32, i32) {
    %c0_i32 = arith.constant 0 : i32
    return %arg0, %arg2, %arg1 : i32, i32, i32
  }
  func.func @transform_1(%arg0: i32, %arg1: i32, %arg2: i32) -> (i32, i32, i32) {
    %c0_i32 = arith.constant 0 : i32
    %c0_i32_0 = arith.constant 0 : i32
    return %arg0, %c0_i32, %arg1 : i32, i32, i32
  }
}

</mosaic_0001>

<llo_original>
// kernel: tpu_custom_call.1
$region0: #{tpu_custom_call.1}
  #allocation0 [shape = 'u32[]', space=smem, size = 0x4, offset = 0x4, fixed_abs, tag = 'smem constant byte address 0x4 - core index']
  #allocation1 [shape = 'u32[144,128]{1,0:T(1,128)}', space=vmem, size = 0x12000, scoped, tag = 'internal scratch']
  #allocation2 [shape = 'f32[1,256]{1,0:T(1,128)}', space=vmem, size = 0x400, scoped, tag = 'scratch operand']
  #allocation3 [shape = 'f32[1,256]{1,0:T(1,128)}', space=vmem, size = 0x400, scoped, tag = 'scratch operand']
  %s0 = inlined_call_operand.hbm [shape: f32[2,4,256], index: 0, kind: input, shape index: {}]
  %s1 = inlined_call_operand.hbm [shape: f32[2,2,256], index: 1, kind: output, shape index: {}]
  %s2 = sld [smem:[#allocation0]]
  $region53: #{tpu_custom_call.1} parent=0
    _
  %s4 = ssub.s32 1, %s2
  %s5 = scalar_select 0, %s4, %s2
  $region1: #{tpu_custom_call.1} parent=0
    #allocation4 [shape = 'u8[8192]{0}', space=vmem, size = 0x2000, scoped, tag = 'input window, operand 0']
    #allocation5 [shape = 's32[2]{0}', space=sflag, size = 0x8, scoped, tag = 'scoped memory for tpu_custom_call.1']
    #allocation6 [shape = 's32[2]{0}', space=sflag, size = 0x8, scoped, tag = 'scoped memory for tpu_custom_call.1']
    #allocation7 [shape = 'u8[4096]{0}', space=vmem, size = 0x1000, scoped, tag = 'output window, operand 0']
    %6 = vsyncpa [#allocation5], 0
    %s7 = scalar_lea.sflag [#allocation5], 1
    %8 = vsyncpa %s7, 0
    %9 = vsyncpa [#allocation6], 0
    %s10 = scalar_lea.sflag [#allocation6], 1
    %11 = vsyncpa %s10, 0
    loop: start=0, step=1, limit=4
    $region2: #{tpu_custom_call.1} parent=1 // loop_pre_header
      _
    $region3: #{tpu_custom_call.1} parent=1 // loop_header
      %s13 = sphi 0, %s17
      %p14 = scmp.ge.s32.totalorder %s13, 4
      %s20 = sphi 0, %s39
      %s21 = sphi 0, %s35
      %s22 = sphi 0, %s31
      %s23 = sphi 0, %s20
      %s24 = sphi 0, %s21
      %s25 = sphi 0, %s22
      %s26 = sphi 0, %s23
      %s27 = sphi 0, %s24
      %s28 = sphi 0, %s25
      %s46 = sphi 0, %s48
      %s49 = sphi 0, %s46
      %s50 = sphi 0, %s49
      %s66 = sphi 0, %s50
      %s74 = sphi 0, %s76
      %s77 = sphi 0, %s74
      %s78 = sphi 0, %s77
      %s94 = sphi 0, %s78
    $region4: #{tpu_custom_call.1} parent=1 // loop_header_branch
      %16 = sbr.rel (%p14) target = $region8
    $region5: #{tpu_custom_call.1} parent=1 // loop_body
      %s18 = ssub.s32 %s13, 1
      %s19 = ssub.s32 %s13, 2
      %s29 = sadd.s32 1, %s22
      %p30 = scmp.ge.s32.totalorder %s29, 1
      %s31 = scalar_select %p30, 0, %s29
      %s32 = sadd.s32 1, %s21
      %s33 = scalar_select %p30, %s32, %s21
      %p34 = scmp.ge.s32.totalorder %s33, 1
      %s35 = scalar_select %p34, 0, %s33
      %s36 = sadd.s32 1, %s20
      %s37 = scalar_select %p34, %s36, %s20
      %p38 = scmp.ge.s32.totalorder %s37, 2
      %s39 = scalar_select %p38, 0, %s37
      %s40 = ssub.s32 %s20, %s39
      %s41 = ssub.s32 %s22, %s31
      %s42 = sor.u32 %s40, %s41
      %s43 = ssub.s32 %s21, %s35
      %s44 = sor.u32 %s42, %s43
      %p45 = scmp.eq.s32.totalorder %s44, 0
      %s47 = sadd.s32 %s46, 1
      %s48 = scalar_select %p45, %s46, %s47
      %p51 = pneg %p45
      %p52 = scmp.eq.s32.totalorder %s13, 1
      %p53 = por %p51, %p52
      %p54 = scmp.ne.s32.totalorder %s46, %s49
      %p55 = scmp.eq.s32.totalorder %s13, 0
      %p56 = por %p54, %p55
      %p57 = scmp.ne.s32.totalorder %s46, %s49
      %p58 = scmp.eq.s32.totalorder %s18, 1
      %p59 = por %p57, %p58
      %p60 = scmp.ne.s32.totalorder %s49, %s50
      %p61 = scmp.eq.s32.totalorder %s18, 0
      %p62 = por %p60, %p61
      %p63 = scmp.ne.s32.totalorder %s49, %s50
      %p64 = scmp.eq.s32.totalorder %s19, 1
      %p65 = por %p63, %p64
      %p67 = scmp.ne.s32.totalorder %s50, %s66
      %p68 = scmp.eq.s32.totalorder %s19, 0
      %p69 = por %p67, %p68
      %s70 = ssub.s32 %s20, %s39
      %s71 = ssub.s32 %s21, %s35
      %s72 = sor.u32 %s70, %s71
      %p73 = scmp.eq.s32.totalorder %s72, 0
      %s75 = sadd.s32 %s74, 1
      %s76 = scalar_select %p73, %s74, %s75
      %p79 = pneg %p73
      %p80 = scmp.eq.s32.totalorder %s13, 1
      %p81 = por %p79, %p80
      %p82 = scmp.ne.s32.totalorder %s74, %s77
      %p83 = scmp.eq.s32.totalorder %s13, 0
      %p84 = por %p82, %p83
      %p85 = scmp.ne.s32.totalorder %s74, %s77
      %p86 = scmp.eq.s32.totalorder %s18, 1
      %p87 = por %p85, %p86
      %p88 = scmp.ne.s32.totalorder %s77, %s78
      %p89 = scmp.eq.s32.totalorder %s18, 0
      %p90 = por %p88, %p89
      %p91 = scmp.ne.s32.totalorder %s77, %s78
      %p92 = scmp.eq.s32.totalorder %s19, 1
      %p93 = por %p91, %p92
      %p95 = scmp.ne.s32.totalorder %s78, %s94
      %p96 = scmp.eq.s32.totalorder %s19, 0
      %p97 = por %p95, %p96
      %p98 = scmp.le.s32.totalorder 1, %s13
      %p99 = scmp.lt.s32.totalorder %s13, 3
      %p100 = pnand %p98, %p99
      %p101 = pneg %p100
      // Predicated region
      $region9: #{tpu_custom_call.1} parent=5 // pred_check
        _
      $region10: #{tpu_custom_call.1} parent=5 // pred_check_branch
        %103 = sbr.rel (%p100) target = $region12
      $region11: #{tpu_custom_call.1} parent=5 // pred_region
        %s104 = ssub.s32 %s13, 1
      $region12: #{tpu_custom_call.1} parent=5 // pred_fallthru
        _
      %p105 = scmp.lt.s32.totalorder %s13, 2
      // Predicated region
      $region13: #{tpu_custom_call.1} parent=5 // pred_check
        %p106 = pneg %p105
      $region14: #{tpu_custom_call.1} parent=5 // pred_check_branch
        %108 = sbr.rel (%p106) target = $region16
      $region15: #{tpu_custom_call.1} parent=5 // pred_region
        // Predicated region
        $region17: #{tpu_custom_call.1} parent=15 // pred_check
          %p109 = pneg %p56
        $region18: #{tpu_custom_call.1} parent=15 // pred_check_branch
          %111 = sbr.rel (%p109) target = $region20
        $region19: #{tpu_custom_call.1} parent=15 // pred_region
          %s112 = sand.u32 %s46, 1
          %s113 = scalar_lea.sflag [#allocation5], %s112
          %s114 = sand.u32 %s46, 1
          %s115 = smul.addr %s114, 8
          %s116 = scalar_lea.vmem [#allocation4], %s115
          %s117 = smul.u32 2, %s21
          %s119 = ssub.s32 128, 128
          %120 = vsyncadd %s113, %s119
          %s121 = smul.addr %s22, 2
          %s122 = sadd.s32 %s117, %s121
          %s123 = smul.addr %s20, 2
          %s124 = sadd.s32 %s122, %s123
          %s125 = smul.addr %s124, 64
          %s126 = scalar_lea.hbm %s0, %s125
          %s128 = sshll.u32 %s116, 4
          %s129 = int_to_ptr.vmem [resolvable:$true] %s128
          %131 = dma.hbm_to_vmem [thread:$0]  %s126, 128, %s129, %s113
        $region20: #{tpu_custom_call.1} parent=15 // pred_fallthru
          _
      $region16: #{tpu_custom_call.1} parent=5 // pred_fallthru
        _
      %p132 = scmp.le.s32.totalorder 1, %s13
      %p133 = scmp.lt.s32.totalorder %s13, 3
      %p134 = pnand %p132, %p133
      %p135 = pneg %p134
      // Predicated region
      $region21: #{tpu_custom_call.1} parent=5 // pred_check
        _
      $region22: #{tpu_custom_call.1} parent=5 // pred_check_branch
        %137 = sbr.rel (%p134) target = $region24
      $region23: #{tpu_custom_call.1} parent=5 // pred_region
        %s138 = ssub.s32 %s13, 1
        %s139 = sand.u32 %s49, 1
        %s140 = scalar_lea.sflag [#allocation5], %s139
        %s141 = sand.u32 %s49, 1
        %s142 = smul.addr %s141, 8
        %s143 = scalar_lea.vmem [#allocation4], %s142
        // Predicated region
        $region25: #{tpu_custom_call.1} parent=23 // pred_check
          %p144 = pneg %p62
        $region26: #{tpu_custom_call.1} parent=23 // pred_check_branch
          %146 = sbr.rel (%p144) target = $region28
        $region27: #{tpu_custom_call.1} parent=23 // pred_region
          %147 = dma.done %s140, 128
        $region28: #{tpu_custom_call.1} parent=23 // pred_fallthru
          _
        %s148 = sand.u32 %s49, 1
        %s149 = scalar_lea.sflag [#allocation5], %s148
        %s150 = sand.u32 %s49, 1
        %s151 = smul.addr %s150, 8
        %s152 = scalar_lea.vmem [#allocation4], %s151
        %p153 = pneg %p62
        %p154 = pneg %p59
        %p155 = pneg %p90
        %p156 = pneg %p87
        %s157 = sand.u32 %s77, 1
        %s158 = scalar_lea.sflag [#allocation6], %s157
        %s159 = sand.u32 %s77, 1
        %s160 = smul.addr %s159, 4
        %s161 = scalar_lea.vmem [#allocation7], %s160
        %s162 = smul.u32 2, %s24
        %s163 = smul.u32 2, %s24
        %v164 = vld [vmem:[%s143] sm:$0xff]
        %v166 = vcombine.high %v164, %v164
        %vm168 = vcmask 1043456
        %v169 = vsel %vm168, %v164, 0.0
        %v170 = vrot.slane %v169, 4
        %v171 = vadd.f32 %v169, %v170
        %v172 = vrot.slane %v171, 2
        %v173 = vadd.f32 %v171, %v172
        %v174 = vrot.slane %v173, 1
        %v175 = vadd.f32 %v173, %v174
        %v176 = vsel %vm168, %v166, 0.0
        %v177 = vrot.slane %v176, 4
        %v178 = vadd.f32 %v176, %v177
        %v179 = vrot.slane %v178, 2
        %v180 = vadd.f32 %v178, %v179
        %v181 = vrot.slane %v180, 1
        %v182 = vadd.f32 %v180, %v181
        %v183 = vsel %vm168, %v164, -inf
        %v184 = vrot.slane %v183, 4
        %v185 = vmax.f32 %v183, %v184
        %v186 = vrot.slane %v185, 2
        %v187 = vmax.f32 %v185, %v186
        %v188 = vrot.slane %v187, 1
        %v189 = vmax.f32 %v187, %v188
        %v190 = vsel %vm168, %v166, -inf
        %v191 = vrot.slane %v190, 4
        %v192 = vmax.f32 %v190, %v191
        %v193 = vrot.slane %v192, 2
        %v194 = vmax.f32 %v192, %v193
        %v195 = vrot.slane %v194, 1
        %v196 = vmax.f32 %v194, %v195
        %p197 = scmp.eq.s32.totalorder %s25, 0
        // Predicated region
        $region29: #{tpu_custom_call.1} parent=23 // pred_check
          %p198 = pneg %p197
        $region30: #{tpu_custom_call.1} parent=23 // pred_check_branch
          %200 = sbr.rel (%p198) target = $region32
        $region31: #{tpu_custom_call.1} parent=23 // pred_region
          %v203 = vcombine.low %v175, %v182
          %v205 = vunpack.c.l.s4 1966171168
          %v206 = vunpack.c.0.s8 %v205
          %v207 = vlaneseq
          %v208 = vshrl.u32 %v207, 7
          %v209 = vsub.s32 %v206, %v208
          %v210 = vrot.slane %v203, %v209
          %v212 = vunpack.c.l.s4 1966171168
          %v213 = vunpack.c.0.s8 %v212
          %v214 = vlaneseq
          %v215 = vshrl.u32 %v214, 7
          %v216 = vsub.s32 %v213, %v215
          %v217 = vrot.slane %v210, %v216
          %v219 = vlaneseq
          %vm220 = vcmp.ge.s32.totalorder %v219, 0
          %vm221 = vcmp.lt.s32.totalorder %v219, 256
          %vm222 = vmand %vm220, %vm221
          %223 = vst.msk [vmem:[#allocation2] sm:$0x3] %vm222, %v217
          %v226 = vcombine.low %v189, %v196
          %v228 = vunpack.c.l.s4 1966171168
          %v229 = vunpack.c.0.s8 %v228
          %v230 = vlaneseq
          %v231 = vshrl.u32 %v230, 7
          %v232 = vsub.s32 %v229, %v231
          %v233 = vrot.slane %v226, %v232
          %v235 = vunpack.c.l.s4 1966171168
          %v236 = vunpack.c.0.s8 %v235
          %v237 = vlaneseq
          %v238 = vshrl.u32 %v237, 7
          %v239 = vsub.s32 %v236, %v238
          %v240 = vrot.slane %v233, %v239
          %242 = vst.msk [vmem:[#allocation3] sm:$0x3] %vm222, %v240
        $region32: #{tpu_custom_call.1} parent=23 // pred_fallthru
          _
        %p243 = scmp.gt.s32.totalorder %s25, 0
        // Predicated region
        $region33: #{tpu_custom_call.1} parent=23 // pred_check
          %p244 = pneg %p243
        $region34: #{tpu_custom_call.1} parent=23 // pred_check_branch
          %246 = sbr.rel (%p244) target = $region36
        $region35: #{tpu_custom_call.1} parent=23 // pred_region
          %v247 = vld [vmem:[#allocation2] sm:$0x3]
          %v250 = vcombine.low %v175, %v182
          %v252 = vunpack.c.l.s4 1966171168
          %v253 = vunpack.c.0.s8 %v252
          %v254 = vlaneseq
          %v255 = vshrl.u32 %v254, 7
          %v256 = vsub.s32 %v253, %v255
          %v257 = vrot.slane %v250, %v256
          %v259 = vunpack.c.l.s4 1966171168
          %v260 = vunpack.c.0.s8 %v259
          %v261 = vlaneseq
          %v262 = vshrl.u32 %v261, 7
          %v263 = vsub.s32 %v260, %v262
          %v264 = vrot.slane %v257, %v263
          %v266 = vadd.f32 %v247, %v264
          %v267 = vlaneseq
          %vm268 = vcmp.ge.s32.totalorder %v267, 0
          %vm269 = vcmp.lt.s32.totalorder %v267, 256
          %vm270 = vmand %vm268, %vm269
          %271 = vst.msk [vmem:[#allocation2] sm:$0x3] %vm270, %v266
          %v272 = vld [vmem:[#allocation3] sm:$0x3]
          %v275 = vcombine.low %v189, %v196
          %v277 = vunpack.c.l.s4 1966171168
          %v278 = vunpack.c.0.s8 %v277
          %v279 = vlaneseq
          %v280 = vshrl.u32 %v279, 7
          %v281 = vsub.s32 %v278, %v280
          %v282 = vrot.slane %v275, %v281
          %v284 = vunpack.c.l.s4 1966171168
          %v285 = vunpack.c.0.s8 %v284
          %v286 = vlaneseq
          %v287 = vshrl.u32 %v286, 7
          %v288 = vsub.s32 %v285, %v287
          %v289 = vrot.slane %v282, %v288
          %v291 = vmax.f32 %v272, %v289
          %292 = vst.msk [vmem:[#allocation3] sm:$0x3] %vm270, %v291
        $region36: #{tpu_custom_call.1} parent=23 // pred_fallthru
          _
        // Predicated region
        $region37: #{tpu_custom_call.1} parent=23 // pred_check
          %p293 = pneg %p197
        $region38: #{tpu_custom_call.1} parent=23 // pred_check_branch
          %295 = sbr.rel (%p293) target = $region40
        $region39: #{tpu_custom_call.1} parent=23 // pred_region
          %v296 = vld [vmem:[#allocation2] sm:$0x3]
          %v297 = vmul.f32 %v296, 0.25
          %v298 = vlaneseq
          %vm299 = vcmp.ge.s32.totalorder %v298, 0
          %vm300 = vcmp.lt.s32.totalorder %v298, 256
          %vm301 = vmand %vm299, %vm300
          %302 = vst.msk [vmem:[%s161] ss:$2 sm:$0x3] %vm301, %v297
          %v303 = vld [vmem:[#allocation3] sm:$0x3]
          %s304 = scalar_lea.vmem %s161, 1 [#allocation7]
          %305 = vst.msk [vmem:[%s304] ss:$2 sm:$0x3] %vm301, %v303
        $region40: #{tpu_custom_call.1} parent=23 // pred_fallthru
          _
        %s306 = sand.u32 %s77, 1
        %s307 = scalar_lea.sflag [#allocation6], %s306
        %s308 = sand.u32 %s77, 1
        %s309 = smul.addr %s308, 4
        %s310 = scalar_lea.vmem [#allocation7], %s309
        // Predicated region
        $region41: #{tpu_custom_call.1} parent=23 // pred_check
          %p311 = pneg %p87
        $region42: #{tpu_custom_call.1} parent=23 // pred_check_branch
          %313 = sbr.rel (%p311) target = $region44
        $region43: #{tpu_custom_call.1} parent=23 // pred_region
          %s314 = smul.u32 2, %s24
          %s316 = ssub.s32 64, 64
          %317 = vsyncadd %s307, %s316
          %s318 = smul.addr %s23, 2
          %s319 = sadd.s32 %s314, %s318
          %s320 = smul.addr %s319, 32
          %s321 = scalar_lea.hbm %s1, %s320
          %s323 = sshll.u32 %s310, 4
          %s324 = int_to_ptr.vmem [resolvable:$true] %s323
          %326 = dma.vmem_to_hbm [thread:$0]  %s324, 64, %s321, %s307
        $region44: #{tpu_custom_call.1} parent=23 // pred_fallthru
          _
      $region24: #{tpu_custom_call.1} parent=5 // pred_fallthru
        _
      %p327 = scmp.le.s32.totalorder 2, %s13
      // Predicated region
      $region45: #{tpu_custom_call.1} parent=5 // pred_check
        %p328 = pneg %p327
      $region46: #{tpu_custom_call.1} parent=5 // pred_check_branch
        %330 = sbr.rel (%p328) target = $region48
      $region47: #{tpu_custom_call.1} parent=5 // pred_region
        %s331 = ssub.s32 %s13, 2
        // Predicated region
        $region49: #{tpu_custom_call.1} parent=47 // pred_check
          %p332 = pneg %p93
        $region50: #{tpu_custom_call.1} parent=47 // pred_check_branch
          %334 = sbr.rel (%p332) target = $region52
        $region51: #{tpu_custom_call.1} parent=47 // pred_region
          %s335 = sand.u32 %s78, 1
          %s336 = scalar_lea.sflag [#allocation6], %s335
          %s337 = sand.u32 %s78, 1
          %s338 = smul.addr %s337, 4
          %s339 = scalar_lea.vmem [#allocation7], %s338
          %340 = dma.done %s336, 64
        $region52: #{tpu_custom_call.1} parent=47 // pred_fallthru
          _
      $region48: #{tpu_custom_call.1} parent=5 // pred_fallthru
        _
    $region6: #{tpu_custom_call.1} parent=1 // loop_footer
      %s17 = sadd.s32 1, %s13
    $region7: #{tpu_custom_call.1} parent=1 // loop_footer_branch
      %12 = sbr.rel target = $region3
    $region8: #{tpu_custom_call.1} parent=1 // loop_exit
      _
    %341 = vsyncpa [#allocation5], 1
    %s342 = scalar_lea.sflag [#allocation5], 1
    %343 = vsyncpa %s342, 1
    %344 = vsyncpa [#allocation6], 1
    %s345 = scalar_lea.sflag [#allocation6], 1
    %346 = vsyncpa %s345, 1

</llo_original>
